<compile_context>
chip_gen: v5e
topology: v5e:2x2
jax: 0.10.0
libtpu: 0.0.40
codegen_flags: <defaults>
</compile_context>

<pallas_src>
import jax
import jax.numpy as jnp
import numpy as np
from jax.experimental import pallas as pl
from jax.experimental.pallas import tpu as pltpu


def _num_tensorcores():
    """Best-effort core count: v7x has 2 TensorCores/chip, v5e/v6e have 1."""
    try:
        kind = (jax.devices()[0].device_kind or "").lower()
    except Exception:
        return 1
    return 2 if ("v7" in kind or "7x" in kind) else 1


def _build_tap_masks(H, W, d):
    """(9, H*W) f32 validity mask per 3x3 tap (rows/cols outside the image)."""
    hh = np.arange(H)[:, None]
    ww = np.arange(W)[None, :]
    rows = []
    for kh in range(3):
        for kw in range(3):
            dh, dw = (kh - 1) * d, (kw - 1) * d
            valid = ((hh + dh >= 0) & (hh + dh < H)
                     & (ww + dw >= 0) & (ww + dw < W))
            rows.append(valid.reshape(-1))
    return jnp.asarray(np.stack(rows, 0).astype(np.float32))


def dilated_bottleneck_pallas(x_nchw, params, dilation):
    """x_nchw: (B, C, H, W) float32. Returns (B, C, H, W) float32 (eval BN)."""
    B, C, H, W = x_nchw.shape
    w1, s1, b1, w2, s2, b2, w3, s3, b3 = params
    mid = w1.shape[1]
    d = int(dilation)
    HW = H * W

    # Grid: one step with the whole batch on single-TC parts; core-splittable
    # (2 steps, half the batch each) on v7x.
    num_tc = _num_tensorcores()
    G = num_tc if (B >= num_tc and B % num_tc == 0) else 1
    per = B // G
    L = per * HW                       # lanes per grid step (spatial x batch)

    # ---- fold BN scale into (transposed) conv weights at trace time ----
    w1f = (w1 * s1[None, :]).T                                        # (mid, C)
    w2f = jnp.transpose(w2 * s2[None, None, :], (2, 0, 1)).reshape(mid, 9 * mid)
    w3f = (w3 * s3[None, :]).T                                        # (C, mid)

    # ---- pack the 3 bias columns into one small slab (one DMA, not three) ----
    R = max(C, mid)
    bias_pack = jnp.zeros((R, 3), jnp.float32)
    bias_pack = bias_pack.at[:mid, 0].set(b1)
    bias_pack = bias_pack.at[:mid, 1].set(b2)
    bias_pack = bias_pack.at[:C, 2].set(b3)

    # ---- precomputed per-tap validity masks, tiled over the `per` images ----
    mask = jnp.tile(_build_tap_masks(H, W, d), (1, per))              # (9, L)

    # ---- layout: channels on sublanes, (per images x HW) on lanes ----
    x_slab = (x_nchw.reshape(G, per, C, HW)
              .transpose(0, 2, 1, 3)
              .reshape(G, C, L))

    def kernel(x_ref, w1_ref, w2_ref, w3_ref, b_ref, m_ref, out_ref):
        x = x_ref[...]                                                # (C, L)

        # conv1: 1x1 conv (+folded BN scale) + bias + ReLU
        y1 = jnp.maximum(
            jnp.dot(w1_ref[...], x, preferred_element_type=jnp.float32)
            + b_ref[0:mid, 0:1], 0.0)                                 # (mid, L)

        # conv2: dilated 3x3 conv as ONE K=9*mid matmul.  Each tap is an XLU
        # lane-roll of y1 (no VMEM staging); positions whose source row/col
        # falls outside the image (incl. roll wrap-around / cross-image lanes)
        # are zeroed by the precomputed mask.
        taps = []
        k = 0
        for kh in range(3):
            for kw in range(3):
                s = (kh - 1) * d * W + (kw - 1) * d
                tap = y1 if s == 0 else pltpu.roll(y1, shift=(-s) % L, axis=1)
                if (kh, kw) != (1, 1):        # center tap is always valid
                    tap = tap * m_ref[k:k + 1, :]
                taps.append(tap)
                k += 1
        t = jnp.concatenate(taps, axis=0)                             # (9*mid, L)
        y2 = jnp.maximum(
            jnp.dot(w2_ref[...], t, preferred_element_type=jnp.float32)
            + b_ref[0:mid, 1:2], 0.0)                                 # (mid, L)

        # conv3: 1x1 conv + bias + ReLU, then residual add
        y3 = jnp.maximum(
            jnp.dot(w3_ref[...], y2, preferred_element_type=jnp.float32)
            + b_ref[0:C, 2:3], 0.0)                                   # (C, L)
        out_ref[...] = (y3 + x).astype(out_ref.dtype)

    def full_spec(a):
        nd = a.ndim
        return pl.BlockSpec(a.shape, lambda g, _nd=nd: (0,) * _nd)

    flops = 2 * B * HW * (C * mid + 9 * mid * mid + mid * C) + 5 * B * HW * mid
    bytes_accessed = 4 * (2 * B * C * HW + 2 * mid * C + 9 * mid * mid
                          + 9 * L + 3 * R)

    out_slab = pl.pallas_call(
        kernel,
        out_shape=jax.ShapeDtypeStruct((G, C, L), x_nchw.dtype),
        grid=(G,),
        in_specs=[
            pl.BlockSpec((None, C, L), lambda g: (g, 0, 0)),
            full_spec(w1f), full_spec(w2f), full_spec(w3f),
            full_spec(bias_pack), full_spec(mask),
        ],
        out_specs=pl.BlockSpec((None, C, L), lambda g: (g, 0, 0)),
        compiler_params=pltpu.CompilerParams(
            dimension_semantics=("parallel",)),
        cost_estimate=pl.CostEstimate(
            flops=flops, transcendentals=0, bytes_accessed=bytes_accessed),
    )(x_slab, w1f, w2f, w3f, bias_pack, mask)

    return (out_slab.reshape(G, C, per, HW)
            .transpose(0, 2, 1, 3)
            .reshape(B, C, H, W))


def make_bn_scale_bias(c, base, eps=1e-5):
    """Deterministic eval-mode BatchNorm folded to per-channel scale/bias."""
    idx = jnp.arange(c, dtype=jnp.float32)
    gamma = 1.0 + 0.10 * idx + base
    beta = 0.01 * idx - base
    mean = 0.05 * idx
    var = 1.0 + 0.02 * idx
    scale = gamma / jnp.sqrt(var + eps)
    bias = beta - mean * scale
    return scale, bias


def reference_jax(x_nchw, params, dilation):
    w1, s1, b1, w2, s2, b2, w3, s3, b3 = params
    cin, mid = w1.shape

    def conv_bn_relu(x, w_hwio, scale, bias, dil, pad):
        y = jax.lax.conv_general_dilated(
            x, w_hwio, window_strides=(1, 1),
            padding=[(pad, pad), (pad, pad)],
            rhs_dilation=(dil, dil),
            dimension_numbers=("NCHW", "HWIO", "NCHW"),
            precision=jax.lax.Precision.HIGHEST)
        return jnp.maximum(
            y * scale.reshape(1, -1, 1, 1) + bias.reshape(1, -1, 1, 1), 0.0)

    y = conv_bn_relu(x_nchw, w1.reshape(1, 1, cin, mid), s1, b1, 1, 0)
    y = conv_bn_relu(y, w2.reshape(3, 3, mid, mid), s2, b2, dilation, dilation)
    y = conv_bn_relu(y, w3.reshape(1, 1, mid, cin), s3, b3, 1, 0)
    return y + x_nchw


if __name__ == "__main__":
    B, C, H, W = 2, 4, 16, 16      # matches PyTorch input (B, C, H, W)
    MID = 8
    DILATION = 2

    key = jax.random.PRNGKey(0)
    k_x, k_w1, k_w2, k_w3 = jax.random.split(key, 4)

    x_nchw = jax.random.normal(k_x, (B, C, H, W), dtype=jnp.float32)

    # Conv weights (no conv bias: ConvModule uses bias=False when norm is set).
    w1 = jax.random.normal(k_w1, (C, MID), dtype=jnp.float32) * 0.2
    w2 = jax.random.normal(k_w2, (9, MID, MID), dtype=jnp.float32) * 0.1
    w3 = jax.random.normal(k_w3, (MID, C), dtype=jnp.float32) * 0.2
    s1, b1 = make_bn_scale_bias(MID, 0.02)
    s2, b2 = make_bn_scale_bias(MID, 0.05)
    s3, b3 = make_bn_scale_bias(C, 0.08)
    params = (w1, s1, b1, w2, s2, b2, w3, s3, b3)

    out = dilated_bottleneck_pallas(x_nchw, params, DILATION)
    out = jax.block_until_ready(out)

    ref = reference_jax(x_nchw, params, DILATION)
    np.testing.assert_allclose(np.asarray(out), np.asarray(ref),
                               rtol=1e-3, atol=1e-3)
    assert out.shape == (B, C, H, W)
    print("KERNEL_OK")
</pallas_src>

<mosaic_0001>
module attributes {stable_mosaic.version = 11 : i64} {
  func.func @kernel(%arg0: i32, %arg1: memref<1x4x512xf32, #tpu.memory_space<vmem>>, %arg2: memref<8x4xf32, #tpu.memory_space<vmem>>, %arg3: memref<8x72xf32, #tpu.memory_space<vmem>>, %arg4: memref<4x8xf32, #tpu.memory_space<vmem>>, %arg5: memref<8x3xf32, #tpu.memory_space<vmem>>, %arg6: memref<9x512xf32, #tpu.memory_space<vmem>>, %arg7: memref<1x4x512xf32, #tpu.memory_space<vmem>>) attributes {dimension_semantics = [#tpu.dimension_semantics<parallel>], iteration_bounds = array<i64: 1>, scalar_prefetch = 0 : i64, scratch_operands = 0 : i64, tpu.core_type = #tpu.core_type<tc>, window_params = [{transform_indices = @transform_0, window_bounds = array<i64: 1, 4, 512>}, {pipeline_mode = #tpu.pipeline_mode<synchronous>, transform_indices = @transform_1, window_bounds = array<i64: 8, 4>}, {pipeline_mode = #tpu.pipeline_mode<synchronous>, transform_indices = @transform_2, window_bounds = array<i64: 8, 72>}, {pipeline_mode = #tpu.pipeline_mode<synchronous>, transform_indices = @transform_3, window_bounds = array<i64: 4, 8>}, {pipeline_mode = #tpu.pipeline_mode<synchronous>, transform_indices = @transform_4, window_bounds = array<i64: 8, 3>}, {pipeline_mode = #tpu.pipeline_mode<synchronous>, transform_indices = @transform_5, window_bounds = array<i64: 9, 512>}, {transform_indices = @transform_6, window_bounds = array<i64: 1, 4, 512>}]} {
    %c0 = arith.constant 0 : index
    %c0_0 = arith.constant 0 : index
    %c0_1 = arith.constant 0 : index
    %0 = vector.load %arg1[%c0, %c0_0, %c0_1] : memref<1x4x512xf32, #tpu.memory_space<vmem>>, vector<1x4x512xf32>
    %1 = vector.shape_cast %0 : vector<1x4x512xf32> to vector<4x512xf32>
    %c0_2 = arith.constant 0 : index
    %c0_3 = arith.constant 0 : index
    %2 = vector.load %arg2[%c0_2, %c0_3] : memref<8x4xf32, #tpu.memory_space<vmem>>, vector<8x4xf32>
    %cst = arith.constant dense<0.000000e+00> : vector<8x512xf32>
    %3 = tpu.matmul %2, %1, %cst {dimension_numbers = #tpu.dot_dimension_numbers<[1], [0], [0], [1], [0, 0, 1, 1], [], []>} : vector<8x4xf32>, vector<4x512xf32>, vector<8x512xf32> -> vector<8x512xf32>
    %c0_4 = arith.constant 0 : index
    %c0_5 = arith.constant 0 : index
    %4 = vector.load %arg5[%c0_4, %c0_5] : memref<8x3xf32, #tpu.memory_space<vmem>>, vector<8x1xf32>
    %5 = vector.broadcast %4 : vector<8x1xf32> to vector<8x512xf32>
    %6 = arith.addf %3, %5 : vector<8x512xf32>
    %cst_6 = arith.constant 0.000000e+00 : f32
    %7 = vector.broadcast %cst_6 : f32 to vector<8x512xf32>
    %8 = arith.maximumf %6, %7 : vector<8x512xf32>
    %c34_i32 = arith.constant 34 : i32
    %9 = tpu.dynamic_rotate %8 by %c34_i32 dim 1 : vector<8x512xf32>, i32 -> vector<8x512xf32>
    %c0_7 = arith.constant 0 : index
    %c0_8 = arith.constant 0 : index
    %10 = vector.load %arg6[%c0_7, %c0_8] : memref<9x512xf32, #tpu.memory_space<vmem>>, vector<1x512xf32>
    %11 = vector.broadcast %10 : vector<1x512xf32> to vector<8x512xf32>
    %12 = arith.mulf %9, %11 : vector<8x512xf32>
    %c32_i32 = arith.constant 32 : i32
    %13 = tpu.dynamic_rotate %8 by %c32_i32 dim 1 : vector<8x512xf32>, i32 -> vector<8x512xf32>
    %c1 = arith.constant 1 : index
    %c0_9 = arith.constant 0 : index
    %14 = vector.load %arg6[%c1, %c0_9] : memref<9x512xf32, #tpu.memory_space<vmem>>, vector<1x512xf32>
    %15 = vector.broadcast %14 : vector<1x512xf32> to vector<8x512xf32>
    %16 = arith.mulf %13, %15 : vector<8x512xf32>
    %c30_i32 = arith.constant 30 : i32
    %17 = tpu.dynamic_rotate %8 by %c30_i32 dim 1 : vector<8x512xf32>, i32 -> vector<8x512xf32>
    %c2 = arith.constant 2 : index
    %c0_10 = arith.constant 0 : index
    %18 = vector.load %arg6[%c2, %c0_10] : memref<9x512xf32, #tpu.memory_space<vmem>>, vector<1x512xf32>
    %19 = vector.broadcast %18 : vector<1x512xf32> to vector<8x512xf32>
    %20 = arith.mulf %17, %19 : vector<8x512xf32>
    %c2_i32 = arith.constant 2 : i32
    %21 = tpu.dynamic_rotate %8 by %c2_i32 dim 1 : vector<8x512xf32>, i32 -> vector<8x512xf32>
    %c3 = arith.constant 3 : index
    %c0_11 = arith.constant 0 : index
    %22 = vector.load %arg6[%c3, %c0_11] : memref<9x512xf32, #tpu.memory_space<vmem>>, vector<1x512xf32>
    %23 = vector.broadcast %22 : vector<1x512xf32> to vector<8x512xf32>
    %24 = arith.mulf %21, %23 : vector<8x512xf32>
    %c510_i32 = arith.constant 510 : i32
    %25 = tpu.dynamic_rotate %8 by %c510_i32 dim 1 : vector<8x512xf32>, i32 -> vector<8x512xf32>
    %c5 = arith.constant 5 : index
    %c0_12 = arith.constant 0 : index
    %26 = vector.load %arg6[%c5, %c0_12] : memref<9x512xf32, #tpu.memory_space<vmem>>, vector<1x512xf32>
    %27 = vector.broadcast %26 : vector<1x512xf32> to vector<8x512xf32>
    %28 = arith.mulf %25, %27 : vector<8x512xf32>
    %c482_i32 = arith.constant 482 : i32
    %29 = tpu.dynamic_rotate %8 by %c482_i32 dim 1 : vector<8x512xf32>, i32 -> vector<8x512xf32>
    %c6 = arith.constant 6 : index
    %c0_13 = arith.constant 0 : index
    %30 = vector.load %arg6[%c6, %c0_13] : memref<9x512xf32, #tpu.memory_space<vmem>>, vector<1x512xf32>
    %31 = vector.broadcast %30 : vector<1x512xf32> to vector<8x512xf32>
    %32 = arith.mulf %29, %31 : vector<8x512xf32>
    %c480_i32 = arith.constant 480 : i32
    %33 = tpu.dynamic_rotate %8 by %c480_i32 dim 1 : vector<8x512xf32>, i32 -> vector<8x512xf32>
    %c7 = arith.constant 7 : index
    %c0_14 = arith.constant 0 : index
    %34 = vector.load %arg6[%c7, %c0_14] : memref<9x512xf32, #tpu.memory_space<vmem>>, vector<1x512xf32>
    %35 = vector.broadcast %34 : vector<1x512xf32> to vector<8x512xf32>
    %36 = arith.mulf %33, %35 : vector<8x512xf32>
    %c478_i32 = arith.constant 478 : i32
    %37 = tpu.dynamic_rotate %8 by %c478_i32 dim 1 : vector<8x512xf32>, i32 -> vector<8x512xf32>
    %c8 = arith.constant 8 : index
    %c0_15 = arith.constant 0 : index
    %38 = vector.load %arg6[%c8, %c0_15] : memref<9x512xf32, #tpu.memory_space<vmem>>, vector<1x512xf32>
    %39 = vector.broadcast %38 : vector<1x512xf32> to vector<8x512xf32>
    %40 = arith.mulf %37, %39 : vector<8x512xf32>
    %41 = tpu.concatenate %12, %16, %20, %24, %8, %28, %32, %36, %40 in 0 : vector<8x512xf32>, vector<8x512xf32>, vector<8x512xf32>, vector<8x512xf32>, vector<8x512xf32>, vector<8x512xf32>, vector<8x512xf32>, vector<8x512xf32>, vector<8x512xf32> -> vector<72x512xf32>
    %c0_16 = arith.constant 0 : index
    %c0_17 = arith.constant 0 : index
    %42 = vector.load %arg3[%c0_16, %c0_17] : memref<8x72xf32, #tpu.memory_space<vmem>>, vector<8x72xf32>
    %cst_18 = arith.constant dense<0.000000e+00> : vector<8x512xf32>
    %43 = tpu.matmul %42, %41, %cst_18 {dimension_numbers = #tpu.dot_dimension_numbers<[1], [0], [0], [1], [0, 0, 1, 1], [], []>} : vector<8x72xf32>, vector<72x512xf32>, vector<8x512xf32> -> vector<8x512xf32>
    %c0_19 = arith.constant 0 : index
    %c1_20 = arith.constant 1 : index
    %44 = vector.load %arg5[%c0_19, %c1_20] : memref<8x3xf32, #tpu.memory_space<vmem>>, vector<8x1xf32>
    %45 = vector.broadcast %44 : vector<8x1xf32> to vector<8x512xf32>
    %46 = arith.addf %43, %45 : vector<8x512xf32>
    %cst_21 = arith.constant 0.000000e+00 : f32
    %47 = vector.broadcast %cst_21 : f32 to vector<8x512xf32>
    %48 = arith.maximumf %46, %47 : vector<8x512xf32>
    %c0_22 = arith.constant 0 : index
    %c0_23 = arith.constant 0 : index
    %49 = vector.load %arg4[%c0_22, %c0_23] : memref<4x8xf32, #tpu.memory_space<vmem>>, vector<4x8xf32>
    %cst_24 = arith.constant dense<0.000000e+00> : vector<4x512xf32>
    %50 = tpu.matmul %49, %48, %cst_24 {dimension_numbers = #tpu.dot_dimension_numbers<[1], [0], [0], [1], [0, 0, 1, 1], [], []>} : vector<4x8xf32>, vector<8x512xf32>, vector<4x512xf32> -> vector<4x512xf32>
    %c0_25 = arith.constant 0 : index
    %c2_26 = arith.constant 2 : index
    %51 = vector.load %arg5[%c0_25, %c2_26] : memref<8x3xf32, #tpu.memory_space<vmem>>, vector<4x1xf32>
    %52 = vector.broadcast %51 : vector<4x1xf32> to vector<4x512xf32>
    %53 = arith.addf %50, %52 : vector<4x512xf32>
    %cst_27 = arith.constant 0.000000e+00 : f32
    %54 = vector.broadcast %cst_27 : f32 to vector<4x512xf32>
    %55 = arith.maximumf %53, %54 : vector<4x512xf32>
    %56 = arith.addf %55, %1 : vector<4x512xf32>
    %c0_28 = arith.constant 0 : index
    %c0_29 = arith.constant 0 : index
    %c0_30 = arith.constant 0 : index
    %57 = vector.load %arg7[%c0_28, %c0_29, %c0_30] : memref<1x4x512xf32, #tpu.memory_space<vmem>>, vector<1x4x512xf32>
    %58 = vector.shape_cast %57 : vector<1x4x512xf32> to vector<4x512xf32>
    %59 = vector.shape_cast %56 : vector<4x512xf32> to vector<1x4x512xf32>
    tpu.vector_store %arg7[%c0_28, %c0_29, %c0_30], %59 {strides = array<i32>} : memref<1x4x512xf32, #tpu.memory_space<vmem>>, vector<1x4x512xf32>,
    return
  }
  func.func @transform_0(%arg0: i32) -> (i32, i32, i32) {
    %c0_i32 = arith.constant 0 : i32
    %c0_i32_0 = arith.constant 0 : i32
    %c0_i32_1 = arith.constant 0 : i32
    return %arg0, %c0_i32, %c0_i32_0 : i32, i32, i32
  }
  func.func @transform_1(%arg0: i32) -> (i32, i32) {
    %c0_i32 = arith.constant 0 : i32
    %c0_i32_0 = arith.constant 0 : i32
    %c0_i32_1 = arith.constant 0 : i32
    return %c0_i32, %c0_i32_0 : i32, i32
  }
  func.func @transform_2(%arg0: i32) -> (i32, i32) {
    %c0_i32 = arith.constant 0 : i32
    %c0_i32_0 = arith.constant 0 : i32
    %c0_i32_1 = arith.constant 0 : i32
    return %c0_i32, %c0_i32_0 : i32, i32
  }
  func.func @transform_3(%arg0: i32) -> (i32, i32) {
    %c0_i32 = arith.constant 0 : i32
    %c0_i32_0 = arith.constant 0 : i32
    %c0_i32_1 = arith.constant 0 : i32
    return %c0_i32, %c0_i32_0 : i32, i32
  }
  func.func @transform_4(%arg0: i32) -> (i32, i32) {
    %c0_i32 = arith.constant 0 : i32
    %c0_i32_0 = arith.constant 0 : i32
    %c0_i32_1 = arith.constant 0 : i32
    return %c0_i32, %c0_i32_0 : i32, i32
  }
  func.func @transform_5(%arg0: i32) -> (i32, i32) {
    %c0_i32 = arith.constant 0 : i32
    %c0_i32_0 = arith.constant 0 : i32
    %c0_i32_1 = arith.constant 0 : i32
    return %c0_i32, %c0_i32_0 : i32, i32
  }
  func.func @transform_6(%arg0: i32) -> (i32, i32, i32) {
    %c0_i32 = arith.constant 0 : i32
    %c0_i32_0 = arith.constant 0 : i32
    %c0_i32_1 = arith.constant 0 : i32
    return %arg0, %c0_i32, %c0_i32_0 : i32, i32, i32
  }
}

</mosaic_0001>

<llo_original>
// kernel: tpu_custom_call.1
$region0: #{tpu_custom_call.1}
  #allocation0 [shape = 'u32[]', space=smem, size = 0x4, offset = 0x4, fixed_abs, tag = 'smem constant byte address 0x4 - core index']
  #allocation1 [shape = 'u32[72,128]{1,0:T(1,128)}', space=vmem, size = 0x9000, scoped, tag = 'internal scratch']
  %s0 = inlined_call_operand.vmem [shape: f32[1,4,512], index: 0, kind: input, shape index: {}]
  %s1 = inlined_call_operand.vmem [shape: f32[8,4], index: 1, kind: input, shape index: {}]
  %s2 = inlined_call_operand.vmem [shape: f32[8,72], index: 2, kind: input, shape index: {}]
  %s3 = inlined_call_operand.hbm [shape: f32[4,8], index: 3, kind: input, shape index: {}]
  %s4 = inlined_call_operand.vmem [shape: f32[8,3], index: 4, kind: input, shape index: {}]
  %s5 = inlined_call_operand.hbm [shape: f32[9,512], index: 5, kind: input, shape index: {}]
  %s6 = inlined_call_operand.hbm [shape: f32[1,4,512], index: 6, kind: output, shape index: {}]
  %s7 = sld [smem:[#allocation0]]
  $region42: #{tpu_custom_call.1} parent=0
    _
  %s9 = ssub.s32 1, %s7
  %s10 = scalar_select 0, %s9, %s7
  $region1: #{tpu_custom_call.1} parent=0
    #allocation2 [shape = 'u8[2048]{0}', space=vmem, size = 0x800, scoped, tag = 'input window, operand 3, single buffered']
    #allocation3 [shape = 's32[1]{0}', space=sflag, size = 0x4, scoped, tag = 'scoped memory for tpu_custom_call.1']
    #allocation4 [shape = 's32[1]{0}', space=sflag, size = 0x4, scoped, tag = 'scoped memory for tpu_custom_call.1']
    #allocation5 [shape = 'u8[32768]{0}', space=vmem, size = 0x8000, scoped, tag = 'input window, operand 5, single buffered']
    #allocation6 [shape = 's32[1]{0}', space=sflag, size = 0x4, scoped, tag = 'scoped memory for tpu_custom_call.1']
    #allocation7 [shape = 'u8[8192]{0}', space=vmem, size = 0x2000, scoped, tag = 'output window, operand 0, single buffered']
    %11 = vsyncpa [#allocation3], 0
    %12 = vsyncpa [#allocation6], 0
    %13 = vsyncpa [#allocation4], 0
    // Predicated region
    $region2: #{tpu_custom_call.1} parent=1 // pred_check
      _
    $region3: #{tpu_custom_call.1} parent=1 // pred_check_branch
      %15 = sbr.rel (0) target = $region5
    $region4: #{tpu_custom_call.1} parent=1 // pred_region
      _
    $region5: #{tpu_custom_call.1} parent=1 // pred_fallthru
      _
    // Predicated region
    $region6: #{tpu_custom_call.1} parent=1 // pred_check
      _
    $region7: #{tpu_custom_call.1} parent=1 // pred_check_branch
      %17 = sbr.rel (0) target = $region9
    $region8: #{tpu_custom_call.1} parent=1 // pred_region
      _
    $region9: #{tpu_custom_call.1} parent=1 // pred_fallthru
      _
    // Predicated region
    $region10: #{tpu_custom_call.1} parent=1 // pred_check
      _
    $region11: #{tpu_custom_call.1} parent=1 // pred_check_branch
      %19 = sbr.rel (0) target = $region13
    $region12: #{tpu_custom_call.1} parent=1 // pred_region
      _
    $region13: #{tpu_custom_call.1} parent=1 // pred_fallthru
      _
    // Predicated region
    $region14: #{tpu_custom_call.1} parent=1 // pred_check
      _
    $region15: #{tpu_custom_call.1} parent=1 // pred_check_branch
      %21 = sbr.rel (0) target = $region17
    $region16: #{tpu_custom_call.1} parent=1 // pred_region
      %23 = vsyncadd [#allocation3], 0
      %s25 = sshll.u32 %s3, 4
      %s26 = int_to_ptr.hbm [resolvable:$true] %s25
      %s27 = sshll.u32 [#allocation2], 4
      %s28 = int_to_ptr.vmem [resolvable:$true] %s27
      %30 = dma.hbm_to_vmem [thread:$0]  %s26, 64, %s28, [#allocation3]
    $region17: #{tpu_custom_call.1} parent=1 // pred_fallthru
      _
    // Predicated region
    $region18: #{tpu_custom_call.1} parent=1 // pred_check
      _
    $region19: #{tpu_custom_call.1} parent=1 // pred_check_branch
      %32 = sbr.rel (0) target = $region21
    $region20: #{tpu_custom_call.1} parent=1 // pred_region
      _
    $region21: #{tpu_custom_call.1} parent=1 // pred_fallthru
      _
    // Predicated region
    $region22: #{tpu_custom_call.1} parent=1 // pred_check
      _
    $region23: #{tpu_custom_call.1} parent=1 // pred_check_branch
      %34 = sbr.rel (0) target = $region25
    $region24: #{tpu_custom_call.1} parent=1 // pred_region
      %36 = vsyncadd [#allocation6], 0
      %s37 = sshll.u32 %s5, 4
      %s38 = int_to_ptr.hbm [resolvable:$true] %s37
      %s39 = sshll.u32 [#allocation5], 4
      %s40 = int_to_ptr.vmem [resolvable:$true] %s39
      %45 = dma.hbm_to_vmem [thread:$0]  %s38, 1024, %s40, [#allocation6], 512, 512, 32
    $region25: #{tpu_custom_call.1} parent=1 // pred_fallthru
      _
    // Predicated region
    $region26: #{tpu_custom_call.1} parent=1 // pred_check
      _
    $region27: #{tpu_custom_call.1} parent=1 // pred_check_branch
      %47 = sbr.rel (0) target = $region29
    $region28: #{tpu_custom_call.1} parent=1 // pred_region
      %49 = dma.done [#allocation3], 64
    $region29: #{tpu_custom_call.1} parent=1 // pred_fallthru
      _
    // Predicated region
    $region30: #{tpu_custom_call.1} parent=1 // pred_check
      _
    $region31: #{tpu_custom_call.1} parent=1 // pred_check_branch
      %51 = sbr.rel (0) target = $region33
    $region32: #{tpu_custom_call.1} parent=1 // pred_region
      %53 = dma.done [#allocation6], 1024
    $region33: #{tpu_custom_call.1} parent=1 // pred_fallthru
      _
    %v54 = vld [vmem:[%s0] sm:$0xff]
    %v55 = vld [vmem:[%s0 + $0x8] sm:$0xff]
    %v56 = vld [vmem:[%s1] sm:$0xff]
    %v57 = vld [vmem:[%s4] sm:$0xff]
    %59 = vset.pattern.permute.xlu0 0
    %60 = vperm.xlu0 %59, %v57
    %v61 = vpop.permute.xlu0 %60
    %65 = vst [vmem:[#allocation1] ss:$2 sm:$0xff] %v54
    %s66 = scalar_lea.vmem [#allocation1], 16
    %67 = vst [vmem:[%s66] ss:$2 sm:$0xff] %v55
    %v68 = vld.sshfl [vmem:[#allocation1] sm:$0xff pattern:$0x75316420]
    %v69 = vld.sshfl [vmem:[#allocation1 + $0x8] sm:$0xff pattern:$0x75316420]
    %v70 = vld.sshfl [vmem:[#allocation1 + $0x10] sm:$0xff pattern:$0x75316420]
    %v71 = vld.sshfl [vmem:[#allocation1 + $0x18] sm:$0xff pattern:$0x75316420]
    %vm72 = vcmask 31744
    %v74 = vsel %vm72, %v56, 0
    %vm76 = vcmask 1043456
    %v77 = vsel %vm76, %v68, 0
    %v79 = vsel %vm76, %v69, 0
    %v81 = vsel %vm76, %v70, 0
    %v83 = vsel %vm76, %v71, 0
    %85 = vmatpush.msra.mxu0 0.0
    %86 = vmatpush.msra.mxu0 0.0
    %87 = vmatpush.msra.mxu0 0.0
    %88 = vmatpush.msra.mxu0 0.0
    %89 = vmatpush.msra.mxu0 0.0
    %90 = vmatpush.msra.mxu0 0.0
    %91 = vmatpush.msra.mxu0 0.0
    %92 = vmatpush.msra.mxu0 0.0
    %93 = vmatpush.msra.mxu0 0.0
    %94 = vmatpush.msra.mxu0 0.0
    %95 = vmatpush.msra.mxu0 0.0
    %96 = vmatpush.msra.mxu0 0.0
    %97 = vmatpush.msra.mxu0 0.0
    %98 = vmatpush.msra.mxu0 0.0
    %99 = vmatpush.msra.mxu0 0.0
    %100 = vmatpush.msra.mxu0 %v77
    %101 = vmatmul.f32.gmra.mxu0 %v74
    %v102 = vpop.f32.mrf.mxu0
    %v103 = vadd.f32 %v61, %v102
    %104 = vdwg.mxu0
    %105 = vmatpush.msra.mxu0 0.0
    %106 = vmatpush.msra.mxu0 0.0
    %107 = vmatpush.msra.mxu0 0.0
    %108 = vmatpush.msra.mxu0 0.0
    %109 = vmatpush.msra.mxu0 0.0
    %110 = vmatpush.msra.mxu0 0.0
    %111 = vmatpush.msra.mxu0 0.0
    %112 = vmatpush.msra.mxu0 0.0
    %113 = vmatpush.msra.mxu0 0.0
    %114 = vmatpush.msra.mxu0 0.0
    %115 = vmatpush.msra.mxu0 0.0
    %116 = vmatpush.msra.mxu0 0.0
    %117 = vmatpush.msra.mxu0 0.0
    %118 = vmatpush.msra.mxu0 0.0
    %119 = vmatpush.msra.mxu0 0.0
    %120 = vmatpush.msra.mxu0 %v79
    %121 = vmatmul.f32.gmra.mxu0 %v74
    %v122 = vpop.f32.mrf.mxu0
    %v123 = vadd.f32 %v61, %v122
    %124 = vdwg.mxu0
    %125 = vmatpush.msra.mxu0 0.0
    %126 = vmatpush.msra.mxu0 0.0
    %127 = vmatpush.msra.mxu0 0.0
    %128 = vmatpush.msra.mxu0 0.0
    %129 = vmatpush.msra.mxu0 0.0
    %130 = vmatpush.msra.mxu0 0.0
    %131 = vmatpush.msra.mxu0 0.0
    %132 = vmatpush.msra.mxu0 0.0
    %133 = vmatpush.msra.mxu0 0.0
    %134 = vmatpush.msra.mxu0 0.0
    %135 = vmatpush.msra.mxu0 0.0
    %136 = vmatpush.msra.mxu0 0.0
    %137 = vmatpush.msra.mxu0 0.0
    %138 = vmatpush.msra.mxu0 0.0
    %139 = vmatpush.msra.mxu0 0.0
    %140 = vmatpush.msra.mxu0 %v81
    %141 = vmatmul.f32.gmra.mxu0 %v74
    %v142 = vpop.f32.mrf.mxu0
    %v143 = vadd.f32 %v61, %v142
    %144 = vdwg.mxu0
    %145 = vmatpush.msra.mxu0 0.0
    %146 = vmatpush.msra.mxu0 0.0
    %147 = vmatpush.msra.mxu0 0.0
    %148 = vmatpush.msra.mxu0 0.0
    %149 = vmatpush.msra.mxu0 0.0
    %150 = vmatpush.msra.mxu0 0.0
    %151 = vmatpush.msra.mxu0 0.0
    %152 = vmatpush.msra.mxu0 0.0
    %153 = vmatpush.msra.mxu0 0.0
    %154 = vmatpush.msra.mxu0 0.0
    %155 = vmatpush.msra.mxu0 0.0
    %156 = vmatpush.msra.mxu0 0.0
    %157 = vmatpush.msra.mxu0 0.0
    %158 = vmatpush.msra.mxu0 0.0
    %159 = vmatpush.msra.mxu0 0.0
    %160 = vmatpush.msra.mxu0 %v83
    %161 = vmatmul.f32.gmra.mxu0 %v74
    %v162 = vpop.f32.mrf.mxu0
    %v163 = vadd.f32 %v61, %v162
    %164 = vdwg.mxu0
    %v165 = vmax.f32 %v103, 0.0
    %v166 = vmax.f32 %v123, 0.0
    %v167 = vmax.f32 %v143, 0.0
    %v168 = vmax.f32 %v163, 0.0
    %169 = vrot.lane.b32.xlu0 %v165, 34
    %v170 = vpop.permute.xlu0 %169
    %171 = vrot.lane.b32.xlu0 %v166, 34
    %v172 = vpop.permute.xlu0 %171
    %173 = vrot.lane.b32.xlu0 %v167, 34
    %v174 = vpop.permute.xlu0 %173
    %175 = vrot.lane.b32.xlu0 %v168, 34
    %v176 = vpop.permute.xlu0 %175
    %v177 = vlaneseq
    %v178 = vand.u32 %v177, 127
    %vm179 = vcmp.lt.s32.totalorder %v178, 34
    %v180 = vsel %vm179, %v174, %v176
    %v181 = vsel %vm179, %v172, %v174
    %v182 = vsel %vm179, %v170, %v172
    %v183 = vsel %vm179, %v176, %v170
    %v184 = vld [vmem:[#allocation5] ss:$8 sm:$0xf]
    %v186 = vperm.slane %v184, 0
    %v187 = vperm.slane %v184, 1
    %v188 = vperm.slane %v184, 2
    %v189 = vperm.slane %v184, 3
    %v194 = vmul.f32 %v183, %v186
    %v195 = vmul.f32 %v182, %v187
    %v196 = vmul.f32 %v181, %v188
    %v197 = vmul.f32 %v180, %v189
    %198 = vrot.lane.b32.xlu0 %v165, 32
    %v199 = vpop.permute.xlu0 %198
    %200 = vrot.lane.b32.xlu0 %v166, 32
    %v201 = vpop.permute.xlu0 %200
    %202 = vrot.lane.b32.xlu0 %v167, 32
    %v203 = vpop.permute.xlu0 %202
    %204 = vrot.lane.b32.xlu0 %v168, 32
    %v205 = vpop.permute.xlu0 %204
    %vm206 = vcmp.lt.s32.totalorder %v178, 32
    %v207 = vsel %vm206, %v203, %v205
    %v208 = vsel %vm206, %v201, %v203
    %v209 = vsel %vm206, %v199, %v201
    %v210 = vsel %vm206, %v205, %v199
    %s211 = scalar_lea.vmem [#allocation5], 1
    %v212 = vld [vmem:[%s211] ss:$8 sm:$0xf]
    %v214 = vperm.slane %v212, 0
    %v215 = vperm.slane %v212, 1
    %v216 = vperm.slane %v212, 2
    %v217 = vperm.slane %v212, 3
    %v222 = vmul.f32 %v210, %v214
    %v223 = vmul.f32 %v209, %v215
    %v224 = vmul.f32 %v208, %v216
    %v225 = vmul.f32 %v207, %v217
    %226 = vrot.lane.b32.xlu0 %v165, 30
    %v227 = vpop.permute.xlu0 %226
    %228 = vrot.lane.b32.xlu0 %v166, 30
    %v229 = vpop.permute.xlu0 %228
    %230 = vrot.lane.b32.xlu0 %v167, 30
    %v231 = vpop.permute.xlu0 %230
    %232 = vrot.lane.b32.xlu0 %v168, 30
    %v233 = vpop.permute.xlu0 %232
    %vm234 = vcmp.lt.s32.totalorder %v178, 30
    %v235 = vsel %vm234, %v231, %v233
    %v236 = vsel %vm234, %v229, %v231
    %v237 = vsel %vm234, %v227, %v229
    %v238 = vsel %vm234, %v233, %v227
    %s239 = scalar_lea.vmem [#allocation5], 2
    %v240 = vld [vmem:[%s239] ss:$8 sm:$0xf]
    %v242 = vperm.slane %v240, 0
    %v243 = vperm.slane %v240, 1
    %v244 = vperm.slane %v240, 2
    %v245 = vperm.slane %v240, 3
    %v250 = vmul.f32 %v238, %v242
    %v251 = vmul.f32 %v237, %v243
    %v252 = vmul.f32 %v236, %v244
    %v253 = vmul.f32 %v235, %v245
    %254 = vrot.lane.b32.xlu0 %v165, 2
    %v255 = vpop.permute.xlu0 %254
    %256 = vrot.lane.b32.xlu0 %v166, 2
    %v257 = vpop.permute.xlu0 %256
    %258 = vrot.lane.b32.xlu0 %v167, 2
    %v259 = vpop.permute.xlu0 %258
    %260 = vrot.lane.b32.xlu0 %v168, 2
    %v261 = vpop.permute.xlu0 %260
    %vm262 = vcmp.lt.s32.totalorder %v178, 2
    %v263 = vsel %vm262, %v259, %v261
    %v264 = vsel %vm262, %v257, %v259
    %v265 = vsel %vm262, %v255, %v257
    %v266 = vsel %vm262, %v261, %v255
    %s267 = scalar_lea.vmem [#allocation5], 3
    %v268 = vld [vmem:[%s267] ss:$8 sm:$0xf]
    %v270 = vperm.slane %v268, 0
    %v271 = vperm.slane %v268, 1
    %v272 = vperm.slane %v268, 2
    %v273 = vperm.slane %v268, 3
    %v278 = vmul.f32 %v266, %v270
    %v279 = vmul.f32 %v265, %v271
    %v280 = vmul.f32 %v264, %v272
    %v281 = vmul.f32 %v263, %v273
    %282 = vrot.lane.b32.xlu0 %v165, 126
    %v283 = vpop.permute.xlu0 %282
    %284 = vrot.lane.b32.xlu0 %v166, 126
    %v285 = vpop.permute.xlu0 %284
    %286 = vrot.lane.b32.xlu0 %v167, 126
    %v287 = vpop.permute.xlu0 %286
    %288 = vrot.lane.b32.xlu0 %v168, 126
    %v289 = vpop.permute.xlu0 %288
    %vm290 = vcmp.lt.s32.totalorder %v178, 126
    %v291 = vsel %vm290, %v287, %v289
    %v292 = vsel %vm290, %v285, %v287
    %v293 = vsel %vm290, %v283, %v285
    %v294 = vsel %vm290, %v289, %v283
    %s295 = scalar_lea.vmem [#allocation5], 5
    %v296 = vld [vmem:[%s295] ss:$8 sm:$0xf]
    %v298 = vperm.slane %v296, 0
    %v299 = vperm.slane %v296, 1
    %v300 = vperm.slane %v296, 2
    %v301 = vperm.slane %v296, 3
    %v306 = vmul.f32 %v293, %v298
    %v307 = vmul.f32 %v292, %v299
    %v308 = vmul.f32 %v291, %v300
    %v309 = vmul.f32 %v294, %v301
    %310 = vrot.lane.b32.xlu0 %v165, 98
    %v311 = vpop.permute.xlu0 %310
    %312 = vrot.lane.b32.xlu0 %v166, 98
    %v313 = vpop.permute.xlu0 %312
    %314 = vrot.lane.b32.xlu0 %v167, 98
    %v315 = vpop.permute.xlu0 %314
    %316 = vrot.lane.b32.xlu0 %v168, 98
    %v317 = vpop.permute.xlu0 %316
    %vm318 = vcmp.lt.s32.totalorder %v178, 98
    %v319 = vsel %vm318, %v315, %v317
    %v320 = vsel %vm318, %v313, %v315
    %v321 = vsel %vm318, %v311, %v313
    %v322 = vsel %vm318, %v317, %v311
    %s323 = scalar_lea.vmem [#allocation5], 6
    %v324 = vld [vmem:[%s323] ss:$8 sm:$0xf]
    %v326 = vperm.slane %v324, 0
    %v327 = vperm.slane %v324, 1
    %v328 = vperm.slane %v324, 2
    %v329 = vperm.slane %v324, 3
    %v334 = vmul.f32 %v321, %v326
    %v335 = vmul.f32 %v320, %v327
    %v336 = vmul.f32 %v319, %v328
    %v337 = vmul.f32 %v322, %v329
    %338 = vrot.lane.b32.xlu0 %v165, 96
    %v339 = vpop.permute.xlu0 %338
    %340 = vrot.lane.b32.xlu0 %v166, 96
    %v341 = vpop.permute.xlu0 %340
    %342 = vrot.lane.b32.xlu0 %v167, 96
    %v343 = vpop.permute.xlu0 %342
    %344 = vrot.lane.b32.xlu0 %v168, 96
    %v345 = vpop.permute.xlu0 %344
    %vm346 = vcmp.lt.s32.totalorder %v178, 96
    %v347 = vsel %vm346, %v343, %v345
    %v348 = vsel %vm346, %v341, %v343
    %v349 = vsel %vm346, %v339, %v341
    %v350 = vsel %vm346, %v345, %v339
    %s351 = scalar_lea.vmem [#allocation5], 7
    %v352 = vld [vmem:[%s351] ss:$8 sm:$0xf]
    %v354 = vperm.slane %v352, 0
    %v355 = vperm.slane %v352, 1
    %v356 = vperm.slane %v352, 2
    %v357 = vperm.slane %v352, 3
    %v362 = vmul.f32 %v349, %v354
    %v363 = vmul.f32 %v348, %v355
    %v364 = vmul.f32 %v347, %v356
    %v365 = vmul.f32 %v350, %v357
    %366 = vrot.lane.b32.xlu0 %v165, 94
    %v367 = vpop.permute.xlu0 %366
    %368 = vrot.lane.b32.xlu0 %v166, 94
    %v369 = vpop.permute.xlu0 %368
    %370 = vrot.lane.b32.xlu0 %v167, 94
    %v371 = vpop.permute.xlu0 %370
    %372 = vrot.lane.b32.xlu0 %v168, 94
    %v373 = vpop.permute.xlu0 %372
    %vm374 = vcmp.lt.s32.totalorder %v178, 94
    %v375 = vsel %vm374, %v371, %v373
    %v376 = vsel %vm374, %v369, %v371
    %v377 = vsel %vm374, %v367, %v369
    %v378 = vsel %vm374, %v373, %v367
    %s379 = scalar_lea.vmem [#allocation5], 32
    %v380 = vld [vmem:[%s379] ss:$8 sm:$0xf]
    %v382 = vperm.slane %v380, 0
    %v383 = vperm.slane %v380, 1
    %v384 = vperm.slane %v380, 2
    %v385 = vperm.slane %v380, 3
    %v390 = vmul.f32 %v377, %v382
    %v391 = vmul.f32 %v376, %v383
    %v392 = vmul.f32 %v375, %v384
    %v393 = vmul.f32 %v378, %v385
    %v394 = vld [vmem:[%s2] sm:$0xff]
    %v395 = vld [vmem:[%s4] sm:$0xff]
    %397 = vset.pattern.permute.xlu0 1
    %398 = vperm.xlu0 %397, %v395
    %v399 = vpop.permute.xlu0 %398
    %vm401 = vcmask 588800
    %v403 = vsel %vm401, %v394, 0
    %405 = vmatpush.msra.mxu0 0.0
    %406 = vmatpush.msra.mxu0 0.0
    %407 = vmatpush.msra.mxu0 0.0
    %408 = vmatpush.msra.mxu0 0.0
    %409 = vmatpush.msra.mxu0 0.0
    %410 = vmatpush.msra.mxu0 0.0
    %411 = vmatpush.msra.mxu0 0.0
    %412 = vmatpush.msra.mxu0 %v390
    %413 = vmatpush.msra.mxu0 %v362
    %414 = vmatpush.msra.mxu0 %v334
    %415 = vmatpush.msra.mxu0 %v306
    %416 = vmatpush.msra.mxu0 %v165
    %417 = vmatpush.msra.mxu0 %v278
    %418 = vmatpush.msra.mxu0 %v250
    %419 = vmatpush.msra.mxu0 %v222
    %420 = vmatpush.msra.mxu0 %v194
    %421 = vmatmul.f32.gmra.mxu0 %v403
    %v422 = vpop.f32.mrf.mxu0
    %v423 = vadd.f32 %v399, %v422
    %424 = vdwg.mxu0
    %425 = vmatpush.msra.mxu0 0.0
    %426 = vmatpush.msra.mxu0 0.0
    %427 = vmatpush.msra.mxu0 0.0
    %428 = vmatpush.msra.mxu0 0.0
    %429 = vmatpush.msra.mxu0 0.0
    %430 = vmatpush.msra.mxu0 0.0
    %431 = vmatpush.msra.mxu0 0.0
    %432 = vmatpush.msra.mxu0 %v391
    %433 = vmatpush.msra.mxu0 %v363
    %434 = vmatpush.msra.mxu0 %v335
    %435 = vmatpush.msra.mxu0 %v307
    %436 = vmatpush.msra.mxu0 %v166
    %437 = vmatpush.msra.mxu0 %v279
    %438 = vmatpush.msra.mxu0 %v251
    %439 = vmatpush.msra.mxu0 %v223
    %440 = vmatpush.msra.mxu0 %v195
    %441 = vmatmul.f32.gmra.mxu0 %v403
    %v442 = vpop.f32.mrf.mxu0
    %v443 = vadd.f32 %v399, %v442
    %444 = vdwg.mxu0
    %445 = vmatpush.msra.mxu0 0.0
    %446 = vmatpush.msra.mxu0 0.0
    %447 = vmatpush.msra.mxu0 0.0
    %448 = vmatpush.msra.mxu0 0.0
    %449 = vmatpush.msra.mxu0 0.0
    %450 = vmatpush.msra.mxu0 0.0
    %451 = vmatpush.msra.mxu0 0.0
    %452 = vmatpush.msra.mxu0 %v392
    %453 = vmatpush.msra.mxu0 %v364
    %454 = vmatpush.msra.mxu0 %v336
    %455 = vmatpush.msra.mxu0 %v308
    %456 = vmatpush.msra.mxu0 %v167
    %457 = vmatpush.msra.mxu0 %v280
    %458 = vmatpush.msra.mxu0 %v252
    %459 = vmatpush.msra.mxu0 %v224
    %460 = vmatpush.msra.mxu0 %v196
    %461 = vmatmul.f32.gmra.mxu0 %v403
    %v462 = vpop.f32.mrf.mxu0
    %v463 = vadd.f32 %v399, %v462
    %464 = vdwg.mxu0
    %465 = vmatpush.msra.mxu0 0.0
    %466 = vmatpush.msra.mxu0 0.0
    %467 = vmatpush.msra.mxu0 0.0
    %468 = vmatpush.msra.mxu0 0.0
    %469 = vmatpush.msra.mxu0 0.0
    %470 = vmatpush.msra.mxu0 0.0
    %471 = vmatpush.msra.mxu0 0.0
    %472 = vmatpush.msra.mxu0 %v393
    %473 = vmatpush.msra.mxu0 %v365
    %474 = vmatpush.msra.mxu0 %v337
    %475 = vmatpush.msra.mxu0 %v309
    %476 = vmatpush.msra.mxu0 %v168
    %477 = vmatpush.msra.mxu0 %v281
    %478 = vmatpush.msra.mxu0 %v253
    %479 = vmatpush.msra.mxu0 %v225
    %480 = vmatpush.msra.mxu0 %v197
    %481 = vmatmul.f32.gmra.mxu0 %v403
    %v482 = vpop.f32.mrf.mxu0
    %v483 = vadd.f32 %v399, %v482
    %484 = vdwg.mxu0
    %v485 = vmax.f32 %v423, 0.0
    %v486 = vmax.f32 %v443, 0.0
    %v487 = vmax.f32 %v463, 0.0
    %v488 = vmax.f32 %v483, 0.0
    %v489 = vld [vmem:[#allocation2] sm:$0xf]
    %v490 = vld [vmem:[%s4] sm:$0xf]
    %492 = vset.pattern.permute.xlu0 2
    %493 = vperm.xlu0 %492, %v490
    %v494 = vpop.permute.xlu0 %493
    %vm496 = vcmask 64512
    %v498 = vsel %vm496, %v489, 0
    %500 = vmatpush.msra.mxu0 0.0
    %501 = vmatpush.msra.mxu0 0.0
    %502 = vmatpush.msra.mxu0 0.0
    %503 = vmatpush.msra.mxu0 0.0
    %504 = vmatpush.msra.mxu0 0.0
    %505 = vmatpush.msra.mxu0 0.0
    %506 = vmatpush.msra.mxu0 0.0
    %507 = vmatpush.msra.mxu0 0.0
    %508 = vmatpush.msra.mxu0 0.0
    %509 = vmatpush.msra.mxu0 0.0
    %510 = vmatpush.msra.mxu0 0.0
    %511 = vmatpush.msra.mxu0 0.0
    %512 = vmatpush.msra.mxu0 0.0
    %513 = vmatpush.msra.mxu0 0.0
    %514 = vmatpush.msra.mxu0 0.0
    %515 = vmatpush.msra.mxu0 %v485
    %516 = vmatmul.f32.gmra.mxu0 %v498
    %v517 = vpop.f32.mrf.mxu0
    %v518 = vadd.f32 %v494, %v517
    %519 = vdwg.mxu0
    %520 = vmatpush.msra.mxu0 0.0
    %521 = vmatpush.msra.mxu0 0.0
    %522 = vmatpush.msra.mxu0 0.0
    %523 = vmatpush.msra.mxu0 0.0
    %524 = vmatpush.msra.mxu0 0.0
    %525 = vmatpush.msra.mxu0 0.0
    %526 = vmatpush.msra.mxu0 0.0
    %527 = vmatpush.msra.mxu0 0.0
    %528 = vmatpush.msra.mxu0 0.0
    %529 = vmatpush.msra.mxu0 0.0
    %530 = vmatpush.msra.mxu0 0.0
    %531 = vmatpush.msra.mxu0 0.0
    %532 = vmatpush.msra.mxu0 0.0
    %533 = vmatpush.msra.mxu0 0.0
    %534 = vmatpush.msra.mxu0 0.0
    %535 = vmatpush.msra.mxu0 %v486
    %536 = vmatmul.f32.gmra.mxu0 %v498
    %v537 = vpop.f32.mrf.mxu0
    %v538 = vadd.f32 %v494, %v537
    %539 = vdwg.mxu0
    %540 = vmatpush.msra.mxu0 0.0
    %541 = vmatpush.msra.mxu0 0.0
    %542 = vmatpush.msra.mxu0 0.0
    %543 = vmatpush.msra.mxu0 0.0
    %544 = vmatpush.msra.mxu0 0.0
    %545 = vmatpush.msra.mxu0 0.0
    %546 = vmatpush.msra.mxu0 0.0
    %547 = vmatpush.msra.mxu0 0.0
    %548 = vmatpush.msra.mxu0 0.0
    %549 = vmatpush.msra.mxu0 0.0
    %550 = vmatpush.msra.mxu0 0.0
    %551 = vmatpush.msra.mxu0 0.0
    %552 = vmatpush.msra.mxu0 0.0
    %553 = vmatpush.msra.mxu0 0.0
    %554 = vmatpush.msra.mxu0 0.0
    %555 = vmatpush.msra.mxu0 %v487
    %556 = vmatmul.f32.gmra.mxu0 %v498
    %v557 = vpop.f32.mrf.mxu0
    %v558 = vadd.f32 %v494, %v557
    %559 = vdwg.mxu0
    %560 = vmatpush.msra.mxu0 0.0
    %561 = vmatpush.msra.mxu0 0.0
    %562 = vmatpush.msra.mxu0 0.0
    %563 = vmatpush.msra.mxu0 0.0
    %564 = vmatpush.msra.mxu0 0.0
    %565 = vmatpush.msra.mxu0 0.0
    %566 = vmatpush.msra.mxu0 0.0
    %567 = vmatpush.msra.mxu0 0.0
    %568 = vmatpush.msra.mxu0 0.0
    %569 = vmatpush.msra.mxu0 0.0
    %570 = vmatpush.msra.mxu0 0.0
    %571 = vmatpush.msra.mxu0 0.0
    %572 = vmatpush.msra.mxu0 0.0
    %573 = vmatpush.msra.mxu0 0.0
    %574 = vmatpush.msra.mxu0 0.0
    %575 = vmatpush.msra.mxu0 %v488
    %576 = vmatmul.f32.gmra.mxu0 %v498
    %v577 = vpop.f32.mrf.mxu0
    %v578 = vadd.f32 %v494, %v577
    %579 = vdwg.mxu0
    %v580 = vmax.f32 %v518, 0.0
    %v581 = vmax.f32 %v538, 0.0
    %v582 = vmax.f32 %v558, 0.0
    %v583 = vmax.f32 %v578, 0.0
    %584 = vst [vmem:[#allocation1] ss:$2 sm:$0xff] %v54
    %s585 = scalar_lea.vmem [#allocation1], 16
    %586 = vst [vmem:[%s585] ss:$2 sm:$0xff] %v55
    %v587 = vld.sshfl [vmem:[#allocation1] sm:$0xff pattern:$0x75316420]
    %v588 = vld.sshfl [vmem:[#allocation1 + $0x8] sm:$0xff pattern:$0x75316420]
    %v589 = vld.sshfl [vmem:[#allocation1 + $0x10] sm:$0xff pattern:$0x75316420]
    %v590 = vld.sshfl [vmem:[#allocation1 + $0x18] sm:$0xff pattern:$0x75316420]
    %v595 = vadd.f32 %v580, %v587
    %v596 = vadd.f32 %v581, %v588
    %v597 = vadd.f32 %v582, %v589
    %v598 = vadd.f32 %v583, %v590
    %v603 = vrot.slane %v596, 4
    %v604 = vrot.slane %v598, 4
    %v605 = vsel %vm76, %v595, %v603
    %v606 = vsel %vm76, %v597, %v604
    %609 = vst [vmem:[#allocation7] sm:$0xff] %v605
    %610 = vst [vmem:[#allocation7 + $0x8] sm:$0xff] %v606
    // Predicated region
    $region34: #{tpu_custom_call.1} parent=1 // pred_check
      _
    $region35: #{tpu_custom_call.1} parent=1 // pred_check_branch
      %612 = sbr.rel (0) target = $region37
    $region36: #{tpu_custom_call.1} parent=1 // pred_region
      %614 = vsyncadd [#allocation4], 0
      %s616 = sshll.u32 [#allocation7], 4
      %s617 = int_to_ptr.vmem [resolvable:$true] %s616
      %s618 = sshll.u32 %s6, 4
      %s619 = int_to_ptr.hbm [resolvable:$true] %s618
      %621 = dma.vmem_to_hbm [thread:$0]  %s617, 256, %s619, [#allocation4]
    $region37: #{tpu_custom_call.1} parent=1 // pred_fallthru
      _
    // Predicated region
    $region38: #{tpu_custom_call.1} parent=1 // pred_check
      _
    $region39: #{tpu_custom_call.1} parent=1 // pred_check_branch
      %623 = sbr.rel (0) target = $region41
    $region40: #{tpu_custom_call.1} parent=1 // pred_region
      %625 = dma.done [#allocation4], 256
    $region41: #{tpu_custom_call.1} parent=1 // pred_fallthru
      _
    %626 = vsyncpa [#allocation3], 1
    %627 = vsyncpa [#allocation6], 1
    %628 = vsyncpa [#allocation4], 1

</llo_original>
